<compile_context>
chip_gen: v5e
topology: v5e:2x2
jax: 0.10.0
libtpu: 0.0.40
codegen_flags: <defaults>
</compile_context>

<pallas_src>
import functools
import itertools

import numpy as np
import jax
import jax.numpy as jnp
from jax.experimental import pallas as pl
from jax.experimental.pallas import tpu as pltpu


# ----------------------------------------------------------------------------------
# Greedy NMS_v0 matcher kernel
# ----------------------------------------------------------------------------------
def _nms_kernel(boxes_vmem_ref, boxes_smem_ref, keep_ref, *, overlap, k, kpad):
    """Greedy 1-D NMS over score-descending, lane-compacted candidates.

    boxes_vmem_ref: [2, kpad] f32 VMEM (row 0 = x1, row 1 = x2), lanes sorted by score desc.
    boxes_smem_ref: same data in SMEM for O(1) scalar lookup of the picked box.
    keep_ref      : [1, kpad] i32 VMEM output; slot s holds the lane picked at step s,
                    sentinel (= kpad) otherwise.
    """
    boxes = boxes_vmem_ref[...]                           # [2, kpad]
    x1 = boxes[0:1, :]                                    # [1, kpad]
    x2 = boxes[1:2, :]
    area = x2 - x1

    lane_idx = jax.lax.broadcasted_iota(jnp.int32, (1, kpad), 1)
    sentinel = jnp.int32(kpad)

    # Vreg-carried state (review items 1, 3, 4): no ref traffic inside the loop.
    #   cand[lane] = lane while still an active candidate, else sentinel
    #   keep[slot] = picked lane for pick #slot, else sentinel
    cand0 = jnp.where(lane_idx < k, lane_idx, sentinel)
    keep0 = jnp.full((1, kpad), kpad, jnp.int32)
    # Lanes are score-sorted, so "best remaining" == smallest active lane index.
    i0 = jnp.min(cand0)

    def cond(carry):
        i, count, _, _ = carry
        return jnp.logical_and(i < sentinel, count < k)

    def body(carry):
        i, count, cand, keep = carry

        # Picked box via two scalar SMEM loads (review item 2); only ever used in vector
        # context so no scalar-f32 ALU is required.
        x1_i = boxes_smem_ref[0, i]
        x2_i = boxes_smem_ref[1, i]

        xx1 = jnp.maximum(x1, x1_i)
        xx2 = jnp.minimum(x2, x2_i)

        if overlap == 0.0:
            # Specialized threshold (review item 6): iou <= 0  <=>  inter == 0, and then
            # union == area + area_i.  union == 0 -> suppressed (reference iou = NaN).
            union_pos = ((area + x2_i) - x1_i) > 0.0
            survive = jnp.logical_and(xx2 <= xx1, union_pos)
        else:
            inter = jnp.maximum(xx2 - xx1, 0.0)
            union = ((area - inter) + x2_i) - x1_i
            survive = jnp.logical_and(inter <= overlap * union, union > 0.0)

        still_active = jnp.logical_and(survive, lane_idx != i)
        new_cand = jnp.where(still_active, cand, sentinel)

        # Record the picked lane in slot `count` — pure vreg select, no loads/stores.
        new_keep = jnp.where(lane_idx == count, i, keep)

        # Next pick straight from the freshly built mask: the single per-pick XLU reduce,
        # which doubles as the early-exit test.
        return jnp.min(new_cand), count + 1, new_cand, new_keep

    _, _, _, keep_final = jax.lax.while_loop(cond, body, (i0, jnp.int32(0), cand0, keep0))
    keep_ref[...] = keep_final                            # single lane-dense write


def nms_v0_pallas(pred_logits, pred_segments, overlap=0.0, top_k=200):
    """Runs the NMS hot loop in a Pallas TPU kernel.

    Returns:
      keep_lanes: [1, kpad] int32 — picked lane slots in pick order (sentinel = kpad).
      top_idx:    [k] int32        — lane -> original prior index map (score descending).
    """
    B, Q, C = pred_logits.shape
    N = B * Q
    boxes_flat = pred_segments.reshape(N, 2).astype(jnp.float32)

    # Scores: class max taken once, in the source dtype (review item 7).
    scores = jnp.max(pred_logits, axis=-1).reshape(N)

    k = min(N, top_k)
    kpad = max(128, ((k + 127) // 128) * 128)             # lane-dense width

    # Candidate compaction: score-descending gather of the top-k boxes.
    # TODO(synk): for large N, replace jax.lax.top_k with jax.lax.approx_max_k (the kernel
    # only needs score-descending candidates) — the full sort dominates wall clock at scale.
    _, top_idx = jax.lax.top_k(scores.astype(jnp.float32), k)
    boxes_sorted = boxes_flat[top_idx]                    # [k, 2]
    pad = kpad - k
    if pad:
        boxes_sorted = jnp.pad(boxes_sorted, ((0, pad), (0, 0)))
    boxes_2k = jnp.transpose(boxes_sorted)                # [2, kpad]

    keep_lanes = pl.pallas_call(
        functools.partial(_nms_kernel, overlap=float(overlap), k=k, kpad=kpad),
        out_shape=jax.ShapeDtypeStruct((1, kpad), jnp.int32),
        in_specs=[pl.BlockSpec(memory_space=pltpu.MemorySpace.VMEM),
                  pl.BlockSpec(memory_space=pltpu.MemorySpace.SMEM)],
        out_specs=pl.BlockSpec(memory_space=pltpu.MemorySpace.VMEM),
    )(boxes_2k, boxes_2k)
    return keep_lanes, top_idx


def finalize_like_torch(keep_lanes_np, top_idx_np):
    """Host glue reproducing `keep = keep[keep.gt(0)]; cat([zeros, keep]).int()`.
    (Bug-compatible with PyTorch: a legitimately selected prior 0 is dropped.)"""
    keep_lanes = np.asarray(keep_lanes_np).reshape(-1)
    top_idx = np.asarray(top_idx_np).reshape(-1)
    kpad = keep_lanes.shape[0]
    picked = keep_lanes[keep_lanes < kpad]                # lane slots, in pick order
    kept_orig = top_idx[picked]                           # map back to original indices
    kept = kept_orig[kept_orig > 0]
    return np.concatenate([np.zeros_like(kept)[None, :], kept[None, :]], axis=0).astype(np.int32)


def nms_v0_reference_numpy(pred_logits, pred_segments, overlap=0.0, top_k=200):
    """Faithful numpy transcription of the PyTorch NMS forward (for verification)."""
    logits = np.asarray(pred_logits).reshape(-1, pred_logits.shape[-1])
    boxes = np.asarray(pred_segments).reshape(-1, 2)
    scores = logits.max(-1)
    N = scores.shape[0]
    keep = np.zeros(N, dtype=np.int64)
    if boxes.size == 0:
        return keep
    x1 = boxes[:, 0]
    x2 = boxes[:, 1]
    area = (x2 - x1) * 1.0
    idx = np.argsort(scores, kind="stable")
    idx = idx[-top_k:]
    count = 0
    while idx.size > 0:
        i = idx[-1]
        keep[count] = i
        count += 1
        if idx.size == 1:
            break
        idx = idx[:-1]
        xx1 = np.maximum(x1[idx], x1[i])
        xx2 = np.minimum(x2[idx], x2[i])
        w = np.maximum(xx2 - xx1, 0.0)
        inter = w
        union = area[idx] - inter + area[i]
        iou = inter / union
        idx = idx[iou <= overlap]
    kept = keep[keep > 0]
    return np.concatenate([np.zeros_like(kept)[None, :], kept[None, :]], axis=0).astype(np.int32)


# ----------------------------------------------------------------------------------
# HungarianMatcher cost-matrix kernel (softmax + class gather + L1 + 1-D GIoU, fused)
# ----------------------------------------------------------------------------------
def _hungarian_cost_kernel(logits_ref, pred_ref, tgt_ref, tgt_cls_ref, out_ref, *,
                           num_classes, w_class, w_segment, w_siou):
    """Fused cost matrix C[n, t] for all (prediction, target) pairs.

    logits_ref : [N, C]    f32  raw class logits (softmax done in-kernel)
    pred_ref   : [N, 4]    f32  columns (x1, x2, x1*len_b, x2*len_b)
    tgt_ref    : [4, Tpad] f32  rows    (x1, x2, x1*len,  x2*len), padded cols = 0
    tgt_cls_ref: [1, Tpad] f32  target class id (padded cols = -1)
    out_ref    : [N, Tpad] f32
    """
    logits = logits_ref[...]                              # [N, C]
    m = jnp.max(logits, axis=-1, keepdims=True)
    e = jnp.exp(logits - m)
    prob = e / jnp.sum(e, axis=-1, keepdims=True)         # exact softmax

    tgt_cls = tgt_cls_ref[...]                            # [1, Tpad]

    # cost_class = -out_prob[:, tgt_ids]: exact gather as an unrolled select over the
    # trace-time class count (for large C, use prob @ one_hot on the MXU instead).
    cost_class = jnp.zeros(out_ref.shape, jnp.float32)
    for c in range(num_classes):
        sel_c = jnp.where(tgt_cls == float(c), 1.0, 0.0)  # [1, Tpad]
        cost_class = cost_class + sel_c * prob[:, c:c + 1]
    cost_class = -cost_class

    o1 = pred_ref[:, 0:1]
    o2 = pred_ref[:, 1:2]
    o1s = pred_ref[:, 2:3]
    o2s = pred_ref[:, 3:4]
    t1 = tgt_ref[0:1, :]
    t2 = tgt_ref[1:2, :]
    t1s = tgt_ref[2:3, :]
    t2s = tgt_ref[3:4, :]

    # torch.cdist(out_segment, tgt_segment, p=1)
    cost_segment = jnp.abs(o1 - t1) + jnp.abs(o2 - t2)

    # -generalized_segment_iou(tgt_segment_scaled, out_segment_scaled): 1-D GIoU, [N, Tpad]
    inter = jnp.maximum(jnp.minimum(o2s, t2s) - jnp.maximum(o1s, t1s), 0.0)
    union = (o2s - o1s) + (t2s - t1s) - inter
    enclose = jnp.maximum(o2s, t2s) - jnp.minimum(o1s, t1s)
    giou = inter / union - (enclose - union) / enclose
    cost_siou = -giou

    out_ref[...] = w_segment * cost_segment + w_class * cost_class + w_siou * cost_siou


def hungarian_cost_matrix_pallas(pred_logits, pred_segments, targets,
                                 cost_class=1.0, cost_segment=1.0, cost_siou=1.0):
    """Returns the flattened [bs*num_queries, T_total] cost matrix of HungarianMatcher."""
    bs, Q, num_classes = pred_logits.shape
    N = bs * Q
    logits_flat = pred_logits.reshape(N, num_classes).astype(jnp.float32)
    out_seg = pred_segments.reshape(N, 2).astype(jnp.float32)

    lengths = jnp.asarray([float(t["length"]) for t in targets], jnp.float32)   # [bs]
    out_seg_scaled = out_seg * jnp.repeat(lengths, Q)[:, None]                   # [N, 2]

    tgt_ids = jnp.concatenate([jnp.asarray(t["labels"]) for t in targets]).astype(jnp.int32)
    tgt_seg = jnp.concatenate([jnp.asarray(t["segments"], jnp.float32) for t in targets])
    tgt_seg_scaled = jnp.concatenate(
        [jnp.asarray(t["segments"], jnp.float32) * jnp.float32(t["length"]) for t in targets])

    T = int(tgt_ids.shape[0])
    t_pad = max(128, ((T + 127) // 128) * 128)            # lane-dense output width

    pred_in = jnp.concatenate([out_seg, out_seg_scaled], axis=1)                 # [N, 4]
    tgt_rows = jnp.concatenate([tgt_seg, tgt_seg_scaled], axis=1).T              # [4, T]
    tgt_in = jnp.zeros((4, t_pad), jnp.float32).at[:, :T].set(tgt_rows)
    tgt_cls = jnp.full((1, t_pad), -1.0, jnp.float32).at[0, :T].set(tgt_ids.astype(jnp.float32))

    cost = pl.pallas_call(
        functools.partial(_hungarian_cost_kernel, num_classes=num_classes,
                          w_class=float(cost_class), w_segment=float(cost_segment),
                          w_siou=float(cost_siou)),
        out_shape=jax.ShapeDtypeStruct((N, t_pad), jnp.float32),
        in_specs=[pl.BlockSpec(memory_space=pltpu.MemorySpace.VMEM)] * 4,
        out_specs=pl.BlockSpec(memory_space=pltpu.MemorySpace.VMEM),
    )(logits_flat, pred_in, tgt_in, tgt_cls)
    return cost[:, :T]


def hungarian_cost_matrix_reference_numpy(pred_logits, pred_segments, targets,
                                          cost_class=1.0, cost_segment=1.0, cost_siou=1.0):
    """Independent numpy reference of the fused cost matrix (for verification)."""
    bs, Q, C = pred_logits.shape
    N = bs * Q
    logits = np.asarray(pred_logits).reshape(N, C).astype(np.float32)
    e = np.exp(logits - logits.max(-1, keepdims=True))
    out_prob = e / e.sum(-1, keepdims=True)
    out_seg = np.asarray(pred_segments).reshape(N, 2).astype(np.float32)
    lengths = np.asarray([float(t["length"]) for t in targets], np.float32)
    out_seg_scaled = out_seg * np.repeat(lengths, Q)[:, None]

    tgt_ids = np.concatenate([np.asarray(t["labels"]) for t in targets]).astype(np.int64)
    tgt_seg = np.concatenate([np.asarray(t["segments"], np.float32) for t in targets])
    tgt_seg_scaled = np.concatenate(
        [np.asarray(t["segments"], np.float32) * np.float32(t["length"]) for t in targets])

    cclass = -out_prob[:, tgt_ids]
    cseg = np.abs(out_seg[:, None, :] - tgt_seg[None, :, :]).sum(-1)
    a1, a2 = out_seg_scaled[:, 0:1], out_seg_scaled[:, 1:2]
    b1, b2 = tgt_seg_scaled[None, :, 0], tgt_seg_scaled[None, :, 1]
    inter = np.maximum(np.minimum(a2, b2) - np.maximum(a1, b1), 0.0)
    union = (a2 - a1) + (b2 - b1) - inter
    enclose = np.maximum(a2, b2) - np.minimum(a1, b1)
    giou = inter / union - (enclose - union) / enclose
    return cost_segment * cseg + cost_class * cclass + cost_siou * (-giou)


def assign_per_batch(C_flat, sizes, num_queries):
    """Reproduces: C.view(bs, Q, -1).split(sizes, -1); linear_sum_assignment per batch.
    TODO(synk): scipy.optimize.linear_sum_assignment (sequential Hungarian on host) has no
    clean fixed-shape Pallas equivalent; the exact brute-force below is only for the tiny demo.
    """
    bs = len(sizes)
    C3 = np.asarray(C_flat).reshape(bs, num_queries, -1)
    out, col0 = [], 0
    for b, sz in enumerate(sizes):
        cb = C3[b, :, col0:col0 + sz]                     # [Q, sz]
        col0 += sz
        best, best_rows = None, None
        for rows in itertools.permutations(range(num_queries), sz):
            tot = cb[list(rows), list(range(sz))].sum()
            if best is None or tot < best:
                best, best_rows = tot, rows
        rows = np.asarray(best_rows)
        cols = np.arange(sz)
        order = np.argsort(rows)
        out.append((rows[order].astype(np.int64), cols[order].astype(np.int64)))
    return out


if __name__ == "__main__":
    key = jax.random.PRNGKey(0)
    k1, k2, k3, k4 = jax.random.split(key, 4)

    B, Q, C = 2, 8, 4            # N = B*Q = 16 priors
    overlap, top_k = 0.0, 200

    pred_logits = jax.random.normal(k1, (B, Q, C), dtype=jnp.float32)
    starts = jax.random.uniform(k2, (B, Q, 1), dtype=jnp.float32) * 0.8
    lens = jax.random.uniform(k3, (B, Q, 1), dtype=jnp.float32) * 0.3 + 0.02
    pred_segments = jnp.concatenate([starts, starts + lens], axis=-1)   # [B, Q, 2]

    # ---- greedy NMS matcher (Pallas hot loop) ----
    keep_lanes, top_idx = nms_v0_pallas(pred_logits, pred_segments,
                                        overlap=overlap, top_k=top_k)
    keep_lanes = jax.block_until_ready(keep_lanes)
    top_idx = jax.block_until_ready(top_idx)
    result = finalize_like_torch(keep_lanes, top_idx)
    expected = nms_v0_reference_numpy(np.asarray(pred_logits), np.asarray(pred_segments),
                                      overlap=overlap, top_k=top_k)
    np.testing.assert_array_equal(result, expected)

    # ---- HungarianMatcher cost matrix (Pallas) + host-side assignment ----
    sizes = [2, 3]
    targets = []
    tkeys = jax.random.split(k4, len(sizes) * 3)
    for b, nt in enumerate(sizes):
        ks, kl, kc = tkeys[3 * b], tkeys[3 * b + 1], tkeys[3 * b + 2]
        s = jax.random.uniform(ks, (nt, 1), dtype=jnp.float32) * 0.7
        l = jax.random.uniform(kl, (nt, 1), dtype=jnp.float32) * 0.25 + 0.02
        targets.append({"labels": jax.random.randint(kc, (nt,), 0, C),
                        "segments": jnp.concatenate([s, s + l], axis=-1),
                        "length": 64.0 + 36.0 * b})

    C_pallas = hungarian_cost_matrix_pallas(pred_logits, pred_segments, targets)
    C_pallas = np.asarray(jax.block_until_ready(C_pallas))
    C_ref = hungarian_cost_matrix_reference_numpy(pred_logits, pred_segments, targets)
    np.testing.assert_allclose(C_pallas, C_ref, rtol=1e-3, atol=1e-4)

    indices = assign_per_batch(C_pallas, sizes, Q)
    assert all(len(i) == len(j) == sz for (i, j), sz in zip(indices, sizes))

    print("KERNEL_OK")
</pallas_src>

<mosaic_0001>
module attributes {stable_mosaic.version = 11 : i64} {
  func.func @_nms_kernel(%arg0: memref<2x128xf32, #tpu.memory_space<vmem>>, %arg1: memref<2x128xf32, #tpu.memory_space<smem>>, %arg2: memref<1x128xi32, #tpu.memory_space<vmem>>) attributes {dimension_semantics = [], scalar_prefetch = 0 : i64, scratch_operands = 0 : i64, tpu.core_type = #tpu.core_type<tc>} {
    %c0 = arith.constant 0 : index
    %c0_0 = arith.constant 0 : index
    %0 = vector.load %arg0[%c0, %c0_0] : memref<2x128xf32, #tpu.memory_space<vmem>>, vector<2x128xf32>
    %1 = vector.extract_strided_slice %0 {offsets = [0, 0], sizes = [1, 128], strides = [1, 1]} : vector<2x128xf32> to vector<1x128xf32>
    %2 = vector.extract_strided_slice %0 {offsets = [1, 0], sizes = [1, 128], strides = [1, 1]} : vector<2x128xf32> to vector<1x128xf32>
    %3 = arith.subf %2, %1 : vector<1x128xf32>
    %4 = tpu.iota {dimensions = array<i32: 1>} : vector<1x128xi32>
    %c16_i32 = arith.constant 16 : i32
    %5 = vector.broadcast %c16_i32 : i32 to vector<1x128xi32>
    %6 = arith.cmpi slt, %4, %5 : vector<1x128xi32>
    %c128_i32 = arith.constant 128 : i32
    %7 = vector.broadcast %c128_i32 : i32 to vector<1x128xi32>
    %8 = arith.select %6, %4, %7 : vector<1x128xi1>, vector<1x128xi32>
    %c128_i32_1 = arith.constant 128 : i32
    %9 = vector.broadcast %c128_i32_1 : i32 to vector<1x128xi32>
    %10 = vector.shape_cast %8 : vector<1x128xi32> to vector<1x1x128xi32>
    %cst = arith.constant dense<2147483647> : vector<1xi32>
    %11 = vector.multi_reduction <minsi>, %10, %cst [1, 2] : vector<1x1x128xi32> to vector<1xi32>
    %12 = vector.shape_cast %11 : vector<1xi32> to vector<1x1x1xi32>
    %13 = vector.extract %12[0, 0, 0] : i32 from vector<1x1x1xi32>
    %c128_i32_2 = arith.constant 128 : i32
    %c128_i32_3 = arith.constant 128 : i32
    %c0_i32 = arith.constant 0 : i32
    %14:4 = scf.while (%arg3 = %13, %arg4 = %c0_i32, %arg5 = %8, %arg6 = %9) : (i32, i32, vector<1x128xi32>, vector<1x128xi32>) -> (i32, i32, vector<1x128xi32>, vector<1x128xi32>) {
      %16 = arith.cmpi slt, %arg3, %c128_i32_2 : i32
      %c16_i32_6 = arith.constant 16 : i32
      %17 = arith.cmpi slt, %arg4, %c16_i32_6 : i32
      %18 = arith.andi %16, %17 : i1
      scf.condition(%18) %arg3, %arg4, %arg5, %arg6 : i32, i32, vector<1x128xi32>, vector<1x128xi32>
    } do {
    ^bb0(%arg3: i32, %arg4: i32, %arg5: vector<1x128xi32>, %arg6: vector<1x128xi32>):
      %c0_6 = arith.constant 0 : index
      %16 = arith.index_cast %arg3 : i32 to index
      %17 = memref.load %arg1[%c0_6, %16] : memref<2x128xf32, #tpu.memory_space<smem>>
      %c1 = arith.constant 1 : index
      %18 = arith.index_cast %arg3 : i32 to index
      %19 = memref.load %arg1[%c1, %18] : memref<2x128xf32, #tpu.memory_space<smem>>
      %20 = vector.broadcast %17 : f32 to vector<1x128xf32>
      %21 = arith.maximumf %1, %20 : vector<1x128xf32>
      %22 = vector.broadcast %19 : f32 to vector<1x128xf32>
      %23 = arith.minimumf %2, %22 : vector<1x128xf32>
      %24 = vector.broadcast %19 : f32 to vector<1x128xf32>
      %25 = arith.addf %3, %24 : vector<1x128xf32>
      %26 = vector.broadcast %17 : f32 to vector<1x128xf32>
      %27 = arith.subf %25, %26 : vector<1x128xf32>
      %cst_7 = arith.constant 0.000000e+00 : f32
      %28 = vector.broadcast %cst_7 : f32 to vector<1x128xf32>
      %29 = arith.cmpf ogt, %27, %28 : vector<1x128xf32>
      %30 = arith.cmpf ole, %23, %21 : vector<1x128xf32>
      %31 = arith.andi %30, %29 : vector<1x128xi1>
      %32 = vector.broadcast %arg3 : i32 to vector<1x128xi32>
      %33 = arith.cmpi ne, %4, %32 : vector<1x128xi32>
      %34 = arith.andi %31, %33 : vector<1x128xi1>
      %35 = vector.broadcast %c128_i32_3 : i32 to vector<1x128xi32>
      %36 = arith.select %34, %arg5, %35 : vector<1x128xi1>, vector<1x128xi32>
      %37 = vector.broadcast %arg4 : i32 to vector<1x128xi32>
      %38 = arith.cmpi eq, %4, %37 : vector<1x128xi32>
      %39 = vector.broadcast %arg3 : i32 to vector<1x128xi32>
      %40 = arith.select %38, %39, %arg6 : vector<1x128xi1>, vector<1x128xi32>
      %41 = vector.shape_cast %36 : vector<1x128xi32> to vector<1x1x128xi32>
      %cst_8 = arith.constant dense<2147483647> : vector<1xi32>
      %42 = vector.multi_reduction <minsi>, %41, %cst_8 [1, 2] : vector<1x1x128xi32> to vector<1xi32>
      %43 = vector.shape_cast %42 : vector<1xi32> to vector<1x1x1xi32>
      %44 = vector.extract %43[0, 0, 0] : i32 from vector<1x1x1xi32>
      %c1_i32 = arith.constant 1 : i32
      %45 = arith.addi %arg4, %c1_i32 : i32
      scf.yield %44, %45, %36, %40 : i32, i32, vector<1x128xi32>, vector<1x128xi32>
    }
    %c0_4 = arith.constant 0 : index
    %c0_5 = arith.constant 0 : index
    %15 = vector.load %arg2[%c0_4, %c0_5] : memref<1x128xi32, #tpu.memory_space<vmem>>, vector<1x128xi32>
    tpu.vector_store %arg2[%c0_4, %c0_5], %14#3 {strides = array<i32>} : memref<1x128xi32, #tpu.memory_space<vmem>>, vector<1x128xi32>,
    return
  }
}

</mosaic_0001>

<llo_original>
// kernel: tpu_custom_call.1
$region0: #{tpu_custom_call.1}
  #allocation0 [shape = 'u32[]', space=smem, size = 0x4, offset = 0x4, fixed_abs, tag = 'smem constant byte address 0x4 - core index']
  #allocation1 [shape = 'u32[72,128]{1,0:T(1,128)}', space=vmem, size = 0x9000, scoped, tag = 'internal scratch']
  %s0 = inlined_call_operand.hbm [shape: f32[2,128], index: 0, kind: input, shape index: {}]
  %s1 = inlined_call_operand.hbm [shape: f32[2,128], index: 1, kind: input, shape index: {}]
  %s2 = inlined_call_operand.hbm [shape: s32[1,128], index: 2, kind: output, shape index: {}]
  %s3 = sld [smem:[#allocation0]]
  $region33: #{tpu_custom_call.1} parent=0
    _
  %s5 = ssub.s32 1, %s3
  %s6 = scalar_select 0, %s5, %s3
  $region1: #{tpu_custom_call.1} parent=0
    #allocation2 [shape = 'u8[1024]{0}', space=vmem, size = 0x400, scoped, tag = 'input window, operand 0, single buffered']
    #allocation3 [shape = 's32[1]{0}', space=sflag, size = 0x4, scoped, tag = 'scoped memory for tpu_custom_call.1']
    #allocation4 [shape = 's32[1]{0}', space=sflag, size = 0x4, scoped, tag = 'scoped memory for tpu_custom_call.1']
    #allocation5 [shape = 's32[1]{0}', space=sflag, size = 0x4, scoped, tag = 'scoped memory for tpu_custom_call.1']
    #allocation6 [shape = 'u8[1024]{0}', space=smem, size = 0x400, scoped, tag = 'input window, operand 1, single buffered']
    #allocation7 [shape = 'u8[512]{0}', space=vmem, size = 0x400, scoped, tag = 'output window, operand 0, single buffered']
    %7 = vsyncpa [#allocation3], 0
    %8 = vsyncpa [#allocation5], 0
    %9 = vsyncpa [#allocation4], 0
    // Predicated region
    $region2: #{tpu_custom_call.1} parent=1 // pred_check
      _
    $region3: #{tpu_custom_call.1} parent=1 // pred_check_branch
      %11 = sbr.rel (0) target = $region5
    $region4: #{tpu_custom_call.1} parent=1 // pred_region
      %13 = vsyncadd [#allocation3], 0
      %s15 = sshll.u32 %s0, 4
      %s16 = int_to_ptr.hbm [resolvable:$true] %s15
      %s17 = sshll.u32 [#allocation2], 4
      %s18 = int_to_ptr.vmem [resolvable:$true] %s17
      %20 = dma.hbm_to_vmem [thread:$0]  %s16, 32, %s18, [#allocation3]
    $region5: #{tpu_custom_call.1} parent=1 // pred_fallthru
      _
    // Predicated region
    $region6: #{tpu_custom_call.1} parent=1 // pred_check
      _
    $region7: #{tpu_custom_call.1} parent=1 // pred_check_branch
      %22 = sbr.rel (0) target = $region9
    $region8: #{tpu_custom_call.1} parent=1 // pred_region
      %24 = vsyncadd [#allocation5], 0
      %s26 = sshll.u32 %s1, 4
      %s27 = int_to_ptr.hbm [resolvable:$true] %s26
      %29 = dma.hbm_to_smem %s27, 32, [#allocation6], [#allocation5]
    $region9: #{tpu_custom_call.1} parent=1 // pred_fallthru
      _
    // Predicated region
    $region10: #{tpu_custom_call.1} parent=1 // pred_check
      _
    $region11: #{tpu_custom_call.1} parent=1 // pred_check_branch
      %31 = sbr.rel (0) target = $region13
    $region12: #{tpu_custom_call.1} parent=1 // pred_region
      %33 = dma.done [#allocation3], 32
    $region13: #{tpu_custom_call.1} parent=1 // pred_fallthru
      _
    // Predicated region
    $region14: #{tpu_custom_call.1} parent=1 // pred_check
      _
    $region15: #{tpu_custom_call.1} parent=1 // pred_check_branch
      %35 = sbr.rel (0) target = $region17
    $region16: #{tpu_custom_call.1} parent=1 // pred_region
      %37 = dma.done [#allocation5], 32
    $region17: #{tpu_custom_call.1} parent=1 // pred_fallthru
      _
    %38 = sfence
    %v39 = vld [vmem:[#allocation2] sm:$0x3]
    %v41 = vrot.slane %v39, 7
    %v43 = vsub.f32 %v39, %v41
    %v44 = vlaneseq
    %v45 = vand.u32 %v44, 127
    %vm46 = vcmp.lt.s32.totalorder %v45, 16
    %v47 = vsel %vm46, %v45, 128
    %v48 = vand.u32 %v47, 65535
    %v49 = vshra.s32 %v47, 16
    %v50 = vcvt.s32.f32 %v48
    %v51 = vcvt.s32.f32 %v49
    %52 = vmin.xlane.f32.xlu0 %v51
    %v53 = vpop.xlane.xlu0 %52
    %vm54 = vcmp.eq.f32.partialorder %v51, %v53
    %v55 = vsel %vm54, %v50, inf
    %56 = vmin.xlane.f32.xlu0 %v55
    %v57 = vpop.xlane.xlu0 %56
    %v58 = vcvt.f32.s32 %v57
    %v59 = vcvt.f32.s32 %v53
    %v60 = vshll.u32 %v59, 16
    %v61 = vadd.s32 %v60, %v58
    %s62 = vtos %v61
    // While loop
    $region18: #{tpu_custom_call.1} parent=1 // loop_pre_header
      _
    $region19: #{tpu_custom_call.1} parent=1 // loop_header
      %s64 = sphi %s62, %s127
      %s65 = sphi 0, %s128
      %v66 = vphi %v47, %v98
      %v67 = vphi 128, %v101
      %p68 = scmp.lt.s32.totalorder %s64, 128
      %p69 = scmp.lt.s32.totalorder %s65, 16
      %p70 = pnand %p68, %p69
      %p71 = pneg %p70
    $region20: #{tpu_custom_call.1} parent=1 // loop_header_branch
      %73 = sbr.rel (%p70) target = $region24
    $region21: #{tpu_custom_call.1} parent=1 // loop_body
      %s74 = sld [smem:[#allocation6 + %s64]]
      %s75 = sshra.s32 %s64, 7
      %s76 = sand.u32 %s64, 127
      %s77 = sadd.s32 %s75, 1
      %s78 = smul.u32 %s77, 128
      %s79 = sshra.s32 %s64, 7
      %s80 = sand.u32 %s64, 127
      %s81 = sadd.s32 %s78, %s80
      %s82 = sld [smem:[#allocation6 + %s81]]
      %v83 = vstv %s74
      %v84 = vmax.f32 %v39, %v83
      %v85 = vstv %s82
      %v86 = vmin.f32 %v39, %v85
      %v87 = vadd.f32 %v43, %v85
      %v88 = vsub.f32 %v87, %v83
      %vm89 = vcmp.gt.f32.partialorder %v88, 0.0
      %v91 = vrot.slane %v84, 7
      %vm93 = vcmp.le.f32.partialorder %v86, %v91
      %vm94 = vmand %vm93, %vm89
      %v95 = vstv %s64
      %vm96 = vcmp.ne.s32.totalorder %v45, %v95
      %vm97 = vmand %vm94, %vm96
      %v98 = vsel %vm97, %v66, 128
      %v99 = vstv %s65
      %vm100 = vcmp.eq.s32.totalorder %v45, %v99
      %v101 = vsel %vm100, %v95, %v67
      %vm102 = vcmask 1041409
      %v103 = vsel %vm102, %v98, 2147483647
      %v104 = vand.u32 %v103, 65535
      %v105 = vshra.s32 %v103, 16
      %v106 = vcvt.s32.f32 %v104
      %v107 = vcvt.s32.f32 %v105
      %108 = vmin.xlane.f32.xlu0 %v107
      %v109 = vpop.xlane.xlu0 %108
      %vm110 = vcmp.eq.f32.partialorder %v107, %v109
      %v111 = vsel %vm110, %v106, inf
      %112 = vmin.xlane.f32.xlu0 %v111
      %v113 = vpop.xlane.xlu0 %112
      %v114 = vcvt.f32.s32 %v113
      %v115 = vcvt.f32.s32 %v109
      %v116 = vshll.u32 %v115, 16
      %v117 = vadd.s32 %v116, %v114
      %v118 = vrot.slane %v117, 4
      %vm119 = vcmp.lt.s32.totalorder %v117, %v118
      %v120 = vsel %vm119, %v117, %v118
      %v121 = vrot.slane %v120, 2
      %vm122 = vcmp.lt.s32.totalorder %v120, %v121
      %v123 = vsel %vm122, %v120, %v121
      %v124 = vrot.slane %v123, 1
      %vm125 = vcmp.lt.s32.totalorder %v123, %v124
      %v126 = vsel %vm125, %v123, %v124
      %s127 = vtos %v126
      %s128 = sadd.s32 %s65, 1
    $region22: #{tpu_custom_call.1} parent=1 // loop_footer
      _
    $region23: #{tpu_custom_call.1} parent=1 // loop_footer_branch
      %63 = sbr.rel target = $region19
    $region24: #{tpu_custom_call.1} parent=1 // loop_exit
      _
    %129 = vst [vmem:[#allocation7] sm:$0x1] %v67
    // Predicated region
    $region25: #{tpu_custom_call.1} parent=1 // pred_check
      _
    $region26: #{tpu_custom_call.1} parent=1 // pred_check_branch
      %131 = sbr.rel (0) target = $region28
    $region27: #{tpu_custom_call.1} parent=1 // pred_region
      %133 = vsyncadd [#allocation4], 0
      %s135 = sshll.u32 [#allocation7], 4
      %s136 = int_to_ptr.vmem [resolvable:$true] %s135
      %s137 = sshll.u32 %s2, 4
      %s138 = int_to_ptr.hbm [resolvable:$true] %s137
      %140 = dma.vmem_to_hbm [thread:$0]  %s136, 16, %s138, [#allocation4]
    $region28: #{tpu_custom_call.1} parent=1 // pred_fallthru
      _
    // Predicated region
    $region29: #{tpu_custom_call.1} parent=1 // pred_check
      _
    $region30: #{tpu_custom_call.1} parent=1 // pred_check_branch
      %142 = sbr.rel (0) target = $region32
    $region31: #{tpu_custom_call.1} parent=1 // pred_region
      %144 = dma.done [#allocation4], 16
    $region32: #{tpu_custom_call.1} parent=1 // pred_fallthru
      _
    %145 = vsyncpa [#allocation3], 1
    %146 = vsyncpa [#allocation4], 1
    %147 = vsyncpa [#allocation5], 1

</llo_original>
